<compile_context>
chip_gen: v5e
topology: v5e:2x2
jax: 0.10.0
libtpu: 0.0.40
codegen_flags: <defaults>
</compile_context>

<pallas_src>
import jax
import jax.numpy as jnp
from jax.experimental import pallas as pl
from jax.experimental.pallas import tpu as pltpu

HIDDEN = 30


def _round_up(x, m):
    return ((x + m - 1) // m) * m


def _mlp_kernel(x_ref, w1_ref, b1_ref, w2_ref, b2_ref, o_ref):
    # x: (blk, in)   w1: (in, 30)  b1: (1, 30)  w2: (30, nb_action)  b2: (1, nb_action)
    # o: (blk, nb_action)
    x = x_ref[...]
    h = jnp.dot(x, w1_ref[...], preferred_element_type=jnp.float32) + b1_ref[...]
    h = jnp.maximum(h, 0.0)                      # ReLU on the VPU
    q = jnp.dot(h, w2_ref[...], preferred_element_type=jnp.float32) + b2_ref[...]
    o_ref[...] = q.astype(o_ref.dtype)


def network_forward(state, w1, b1, w2, b2, *, block_b=None, xla_small_batch=0):
    """Forward pass. state: (B, input_size) f32 -> (B, nb_action) f32.

    Weights are stored pre-transposed as (in_features, out_features); biases may
    be (out,) or (1, out).  `xla_small_batch` (>0) enables a plain-XLA fast path
    for batches at/below that size (useful for 1-row action selection in a real
    DQN loop); disabled by default so the Pallas kernel is always exercised.
    """
    B, in_size = state.shape
    hidden = w1.shape[1]
    nb_action = w2.shape[1]

    x = state.astype(jnp.float32)
    w1f = w1.astype(jnp.float32)
    w2f = w2.astype(jnp.float32)
    b1r = jnp.reshape(b1, (1, hidden)).astype(jnp.float32)
    b2r = jnp.reshape(b2, (1, nb_action)).astype(jnp.float32)

    # Tiny-batch fast path: a single fused XLA kernel beats pallas_call dispatch.
    if xla_small_batch and B <= xla_small_batch:
        return jnp.maximum(x @ w1f + b1r, 0.0) @ w2f + b2r

    # Block sizing: >=2 blocks for large batches (v7x megacore), single small
    # block for tiny batches.  Even blk=4096 is <1 MiB of f32 tiles per buffer.
    if block_b is None:
        blk = max(8, min(_round_up(pl.cdiv(B, 2), 8), 4096))
    else:
        blk = _round_up(max(8, block_b), 8)
    grid = (pl.cdiv(B, blk),)

    # Real (unpadded) cost of this op — keeps XLA's scheduler honest.
    flops = 2 * B * (in_size * hidden + hidden * nb_action)
    bytes_accessed = 4 * (B * in_size + B * nb_action
                          + in_size * hidden + hidden
                          + hidden * nb_action + nb_action)

    out = pl.pallas_call(
        _mlp_kernel,
        out_shape=jax.ShapeDtypeStruct((B, nb_action), jnp.float32),
        grid=grid,
        in_specs=[
            # Activations: tiled along the batch grid axis (partial last block
            # is read-padded; its output rows are clipped on store).
            pl.BlockSpec((blk, in_size), lambda i: (i, 0)),
            # Weights/biases: full-extent blocks, constant index_map ->
            # DMA'd once, VMEM-resident; Mosaic lane-pads 30/nb_action in-vreg.
            pl.BlockSpec((in_size, hidden), lambda i: (0, 0)),
            pl.BlockSpec((1, hidden), lambda i: (0, 0)),
            pl.BlockSpec((hidden, nb_action), lambda i: (0, 0)),
            pl.BlockSpec((1, nb_action), lambda i: (0, 0)),
        ],
        out_specs=pl.BlockSpec((blk, nb_action), lambda i: (i, 0)),
        compiler_params=pltpu.CompilerParams(
            dimension_semantics=("parallel",),    # megacore sharding on v7x
        ),
        cost_estimate=pl.CostEstimate(
            flops=flops, transcendentals=0, bytes_accessed=bytes_accessed),
    )(x, w1f, b1r, w2f, b2r)

    return out


def init_params(key, input_size, nb_action, hidden=HIDDEN):
    """Deterministic init mimicking nn.Linear's U(-1/sqrt(fan_in), 1/sqrt(fan_in)).
    Weights stored as (in, out) (transposed relative to PyTorch's (out, in))."""
    k1, k2, k3, k4 = jax.random.split(key, 4)
    lim1 = 1.0 / jnp.sqrt(jnp.float32(input_size))
    lim2 = 1.0 / jnp.sqrt(jnp.float32(hidden))
    w1 = jax.random.uniform(k1, (input_size, hidden), jnp.float32, -lim1, lim1)
    b1 = jax.random.uniform(k2, (1, hidden), jnp.float32, -lim1, lim1)
    w2 = jax.random.uniform(k3, (hidden, nb_action), jnp.float32, -lim2, lim2)
    b2 = jax.random.uniform(k4, (1, nb_action), jnp.float32, -lim2, lim2)
    return w1, b1, w2, b2


if __name__ == "__main__":
    key = jax.random.PRNGKey(0)
    input_size = 8   # e.g. state vector of 8 features
    nb_action = 4
    batch = 2

    kp, kx = jax.random.split(key)
    w1, b1, w2, b2 = init_params(kp, input_size, nb_action)
    state = jax.random.normal(kx, (batch, input_size), jnp.float32)

    # Small-batch run (DQN action-selection case) — exercises the Pallas path.
    q_values = network_forward(state, w1, b1, w2, b2)
    jax.block_until_ready(q_values)

    ref = jnp.maximum(state @ w1 + b1, 0.0) @ w2 + b2
    assert q_values.shape == (batch, nb_action)
    assert jnp.allclose(q_values, ref, atol=1e-5, rtol=1e-5)

    # Larger-batch run exercising the multi-block grid (replay-buffer batch).
    big_batch = 2048
    kb = jax.random.fold_in(kx, 1)
    big_state = jax.random.normal(kb, (big_batch, input_size), jnp.float32)
    q_big = network_forward(big_state, w1, b1, w2, b2)
    jax.block_until_ready(q_big)
    ref_big = jnp.maximum(big_state @ w1 + b1, 0.0) @ w2 + b2
    assert q_big.shape == (big_batch, nb_action)
    assert jnp.allclose(q_big, ref_big, atol=1e-4, rtol=1e-4)

    print("KERNEL_OK")
</pallas_src>

<mosaic_0001>
module attributes {stable_mosaic.version = 11 : i64} {
  func.func @_mlp_kernel(%arg0: i32, %arg1: memref<8x8xf32, #tpu.memory_space<vmem>>, %arg2: memref<8x30xf32, #tpu.memory_space<vmem>>, %arg3: memref<1x30xf32, #tpu.memory_space<vmem>>, %arg4: memref<30x4xf32, #tpu.memory_space<vmem>>, %arg5: memref<1x4xf32, #tpu.memory_space<vmem>>, %arg6: memref<8x4xf32, #tpu.memory_space<vmem>>) attributes {dimension_semantics = [#tpu.dimension_semantics<parallel>], iteration_bounds = array<i64: 1>, scalar_prefetch = 0 : i64, scratch_operands = 0 : i64, tpu.core_type = #tpu.core_type<tc>, window_params = [{transform_indices = @transform_0, window_bounds = array<i64: 8, 8>}, {pipeline_mode = #tpu.pipeline_mode<synchronous>, transform_indices = @transform_1, window_bounds = array<i64: 8, 30>}, {pipeline_mode = #tpu.pipeline_mode<synchronous>, transform_indices = @transform_2, window_bounds = array<i64: 1, 30>}, {pipeline_mode = #tpu.pipeline_mode<synchronous>, transform_indices = @transform_3, window_bounds = array<i64: 30, 4>}, {pipeline_mode = #tpu.pipeline_mode<synchronous>, transform_indices = @transform_4, window_bounds = array<i64: 1, 4>}, {transform_indices = @transform_5, window_bounds = array<i64: 8, 4>}]} {
    %c0 = arith.constant 0 : index
    %c0_0 = arith.constant 0 : index
    %0 = vector.load %arg1[%c0, %c0_0] : memref<8x8xf32, #tpu.memory_space<vmem>>, vector<8x8xf32>
    %c0_1 = arith.constant 0 : index
    %c0_2 = arith.constant 0 : index
    %1 = vector.load %arg2[%c0_1, %c0_2] : memref<8x30xf32, #tpu.memory_space<vmem>>, vector<8x30xf32>
    %cst = arith.constant dense<0.000000e+00> : vector<8x30xf32>
    %2 = tpu.matmul %0, %1, %cst {dimension_numbers = #tpu.dot_dimension_numbers<[1], [0], [0], [1], [0, 0, 1, 1], [], []>} : vector<8x8xf32>, vector<8x30xf32>, vector<8x30xf32> -> vector<8x30xf32>
    %c0_3 = arith.constant 0 : index
    %c0_4 = arith.constant 0 : index
    %3 = vector.load %arg3[%c0_3, %c0_4] : memref<1x30xf32, #tpu.memory_space<vmem>>, vector<1x30xf32>
    %4 = vector.broadcast %3 : vector<1x30xf32> to vector<8x30xf32>
    %5 = arith.addf %2, %4 : vector<8x30xf32>
    %cst_5 = arith.constant 0.000000e+00 : f32
    %6 = vector.broadcast %cst_5 : f32 to vector<8x30xf32>
    %7 = arith.maximumf %5, %6 : vector<8x30xf32>
    %c0_6 = arith.constant 0 : index
    %c0_7 = arith.constant 0 : index
    %8 = vector.load %arg4[%c0_6, %c0_7] : memref<30x4xf32, #tpu.memory_space<vmem>>, vector<30x4xf32>
    %cst_8 = arith.constant dense<0.000000e+00> : vector<8x4xf32>
    %9 = tpu.matmul %7, %8, %cst_8 {dimension_numbers = #tpu.dot_dimension_numbers<[1], [0], [0], [1], [0, 0, 1, 1], [], []>} : vector<8x30xf32>, vector<30x4xf32>, vector<8x4xf32> -> vector<8x4xf32>
    %c0_9 = arith.constant 0 : index
    %c0_10 = arith.constant 0 : index
    %10 = vector.load %arg5[%c0_9, %c0_10] : memref<1x4xf32, #tpu.memory_space<vmem>>, vector<1x4xf32>
    %11 = vector.broadcast %10 : vector<1x4xf32> to vector<8x4xf32>
    %12 = arith.addf %9, %11 : vector<8x4xf32>
    %c0_11 = arith.constant 0 : index
    %c0_12 = arith.constant 0 : index
    %13 = vector.load %arg6[%c0_11, %c0_12] : memref<8x4xf32, #tpu.memory_space<vmem>>, vector<8x4xf32>
    tpu.vector_store %arg6[%c0_11, %c0_12], %12 {strides = array<i32>} : memref<8x4xf32, #tpu.memory_space<vmem>>, vector<8x4xf32>,
    return
  }
  func.func @transform_0(%arg0: i32) -> (i32, i32) {
    %c0_i32 = arith.constant 0 : i32
    %c0_i32_0 = arith.constant 0 : i32
    return %arg0, %c0_i32 : i32, i32
  }
  func.func @transform_1(%arg0: i32) -> (i32, i32) {
    %c0_i32 = arith.constant 0 : i32
    %c0_i32_0 = arith.constant 0 : i32
    %c0_i32_1 = arith.constant 0 : i32
    return %c0_i32, %c0_i32_0 : i32, i32
  }
  func.func @transform_2(%arg0: i32) -> (i32, i32) {
    %c0_i32 = arith.constant 0 : i32
    %c0_i32_0 = arith.constant 0 : i32
    %c0_i32_1 = arith.constant 0 : i32
    return %c0_i32, %c0_i32_0 : i32, i32
  }
  func.func @transform_3(%arg0: i32) -> (i32, i32) {
    %c0_i32 = arith.constant 0 : i32
    %c0_i32_0 = arith.constant 0 : i32
    %c0_i32_1 = arith.constant 0 : i32
    return %c0_i32, %c0_i32_0 : i32, i32
  }
  func.func @transform_4(%arg0: i32) -> (i32, i32) {
    %c0_i32 = arith.constant 0 : i32
    %c0_i32_0 = arith.constant 0 : i32
    %c0_i32_1 = arith.constant 0 : i32
    return %c0_i32, %c0_i32_0 : i32, i32
  }
  func.func @transform_5(%arg0: i32) -> (i32, i32) {
    %c0_i32 = arith.constant 0 : i32
    %c0_i32_0 = arith.constant 0 : i32
    return %arg0, %c0_i32 : i32, i32
  }
}

</mosaic_0001>

<llo_original>
// kernel: tpu_custom_call.1
$region0: #{tpu_custom_call.1}
  #allocation0 [shape = 'u32[]', space=smem, size = 0x4, offset = 0x4, fixed_abs, tag = 'smem constant byte address 0x4 - core index']
  #allocation1 [shape = 'u32[72,128]{1,0:T(1,128)}', space=vmem, size = 0x9000, scoped, tag = 'internal scratch']
  %s0 = inlined_call_operand.vmem [shape: f32[2,8], index: 0, kind: input, shape index: {}]
  %s1 = inlined_call_operand.vmem [shape: f32[8,30], index: 1, kind: input, shape index: {}]
  %s2 = inlined_call_operand.vmem [shape: f32[1,30], index: 2, kind: input, shape index: {}]
  %s3 = inlined_call_operand.vmem [shape: f32[30,4], index: 3, kind: input, shape index: {}]
  %s4 = inlined_call_operand.vmem [shape: f32[1,4], index: 4, kind: input, shape index: {}]
  %s5 = inlined_call_operand.hbm [shape: f32[2,4], index: 5, kind: output, shape index: {}]
  %s6 = sld [smem:[#allocation0]]
  $region30: #{tpu_custom_call.1} parent=0
    _
  %s8 = ssub.s32 1, %s6
  %s9 = scalar_select 0, %s8, %s6
  $region1: #{tpu_custom_call.1} parent=0
    #allocation2 [shape = 'u8[4096]{0}', space=vmem, size = 0x1000, scoped, tag = 'output window, operand 0, single buffered']
    #allocation3 [shape = 's32[1]{0}', space=sflag, size = 0x4, scoped, tag = 'scoped memory for tpu_custom_call.1']
    %10 = vsyncpa [#allocation3], 0
    // Predicated region
    $region2: #{tpu_custom_call.1} parent=1 // pred_check
      _
    $region3: #{tpu_custom_call.1} parent=1 // pred_check_branch
      %12 = sbr.rel (0) target = $region5
    $region4: #{tpu_custom_call.1} parent=1 // pred_region
      _
    $region5: #{tpu_custom_call.1} parent=1 // pred_fallthru
      _
    // Predicated region
    $region6: #{tpu_custom_call.1} parent=1 // pred_check
      _
    $region7: #{tpu_custom_call.1} parent=1 // pred_check_branch
      %14 = sbr.rel (0) target = $region9
    $region8: #{tpu_custom_call.1} parent=1 // pred_region
      _
    $region9: #{tpu_custom_call.1} parent=1 // pred_fallthru
      _
    // Predicated region
    $region10: #{tpu_custom_call.1} parent=1 // pred_check
      _
    $region11: #{tpu_custom_call.1} parent=1 // pred_check_branch
      %16 = sbr.rel (0) target = $region13
    $region12: #{tpu_custom_call.1} parent=1 // pred_region
      _
    $region13: #{tpu_custom_call.1} parent=1 // pred_fallthru
      _
    // Predicated region
    $region14: #{tpu_custom_call.1} parent=1 // pred_check
      _
    $region15: #{tpu_custom_call.1} parent=1 // pred_check_branch
      %18 = sbr.rel (0) target = $region17
    $region16: #{tpu_custom_call.1} parent=1 // pred_region
      _
    $region17: #{tpu_custom_call.1} parent=1 // pred_fallthru
      _
    // Predicated region
    $region18: #{tpu_custom_call.1} parent=1 // pred_check
      _
    $region19: #{tpu_custom_call.1} parent=1 // pred_check_branch
      %20 = sbr.rel (0) target = $region21
    $region20: #{tpu_custom_call.1} parent=1 // pred_region
      _
    $region21: #{tpu_custom_call.1} parent=1 // pred_fallthru
      _
    %v21 = vld [vmem:[%s0] sm:$0xff]
    %v22 = vld [vmem:[%s1] sm:$0xff]
    %v23 = vld [vmem:[%s2] sm:$0x1]
    %v25 = vperm.slane %v23, 0
    %vm27 = vcmask 64512
    %v29 = vsel %vm27, %v21, 0
    %31 = vmatpush.msra.mxu0 0.0
    %32 = vmatpush.msra.mxu0 0.0
    %33 = vmatpush.msra.mxu0 0.0
    %34 = vmatpush.msra.mxu0 0.0
    %35 = vmatpush.msra.mxu0 0.0
    %36 = vmatpush.msra.mxu0 0.0
    %37 = vmatpush.msra.mxu0 0.0
    %38 = vmatpush.msra.mxu0 0.0
    %39 = vmatpush.msra.mxu0 0.0
    %40 = vmatpush.msra.mxu0 0.0
    %41 = vmatpush.msra.mxu0 0.0
    %42 = vmatpush.msra.mxu0 0.0
    %43 = vmatpush.msra.mxu0 0.0
    %44 = vmatpush.msra.mxu0 0.0
    %45 = vmatpush.msra.mxu0 0.0
    %46 = vmatpush.msra.mxu0 %v22
    %47 = vmatmul.f32.gmra.mxu0 %v29
    %v48 = vpop.f32.mrf.mxu0
    %v49 = vadd.f32 %v25, %v48
    %50 = vdwg.mxu0
    %v51 = vmax.f32 %v49, 0.0
    %v52 = vld [vmem:[%s3] sm:$0xff]
    %v53 = vld [vmem:[%s3 + $0x8] sm:$0xff]
    %v54 = vld [vmem:[%s3 + $0x10] sm:$0xff]
    %v55 = vld [vmem:[%s3 + $0x18] sm:$0x3f]
    %v56 = vld [vmem:[%s4] sm:$0x1]
    %v58 = vperm.slane %v56, 0
    %vm60 = vcmask 244736
    %v62 = vsel %vm60, %v51, 0
    %vm64 = vcmask 1045504
    %v66 = vsel %vm64, %v55, 0
    %68 = vmatpush.msra.mxu0 0.0
    %69 = vmatpush.msra.mxu0 0.0
    %70 = vmatpush.msra.mxu0 0.0
    %71 = vmatpush.msra.mxu0 0.0
    %72 = vmatpush.msra.mxu0 0.0
    %73 = vmatpush.msra.mxu0 0.0
    %74 = vmatpush.msra.mxu0 0.0
    %75 = vmatpush.msra.mxu0 0.0
    %76 = vmatpush.msra.mxu0 0.0
    %77 = vmatpush.msra.mxu0 0.0
    %78 = vmatpush.msra.mxu0 0.0
    %79 = vmatpush.msra.mxu0 0.0
    %80 = vmatpush.msra.mxu0 %v66
    %81 = vmatpush.msra.mxu0 %v54
    %82 = vmatpush.msra.mxu0 %v53
    %83 = vmatpush.msra.mxu0 %v52
    %84 = vmatmul.f32.gmra.mxu0 %v62
    %v85 = vpop.f32.mrf.mxu0
    %v86 = vadd.f32 %v58, %v85
    %87 = vdwg.mxu0
    %vm88 = vcmask 31744
    %89 = vst.msk [vmem:[#allocation2] sm:$0xff] %vm88, %v86
    // Predicated region
    $region22: #{tpu_custom_call.1} parent=1 // pred_check
      _
    $region23: #{tpu_custom_call.1} parent=1 // pred_check_branch
      %91 = sbr.rel (0) target = $region25
    $region24: #{tpu_custom_call.1} parent=1 // pred_region
      %93 = vsyncadd [#allocation3], 96
      %s94 = sshll.u32 [#allocation2], 4
      %s95 = int_to_ptr.vmem [resolvable:$true] %s94
      %s96 = sshll.u32 %s5, 4
      %s97 = int_to_ptr.hbm [resolvable:$true] %s96
      %102 = dma.vmem_to_hbm [thread:$0]  %s95, 32, %s97, [#allocation3], 32, 32, 2
    $region25: #{tpu_custom_call.1} parent=1 // pred_fallthru
      _
    // Predicated region
    $region26: #{tpu_custom_call.1} parent=1 // pred_check
      _
    $region27: #{tpu_custom_call.1} parent=1 // pred_check_branch
      %104 = sbr.rel (0) target = $region29
    $region28: #{tpu_custom_call.1} parent=1 // pred_region
      %106 = dma.done [#allocation3], 128
    $region29: #{tpu_custom_call.1} parent=1 // pred_fallthru
      _
    %107 = vsyncpa [#allocation3], 1

</llo_original>
